<compile_context>
chip_gen: v5e
topology: v5e:2x2
jax: 0.10.0
libtpu: 0.0.40
codegen_flags: <defaults>
</compile_context>

<pallas_src>
import functools

import jax
import jax.numpy as jnp
from jax.experimental import pallas as pl
from jax.experimental.pallas import tpu as pltpu

_LANE = 128


def _round_up(x, m):
    return (x + m - 1) // m * m


def _mlp_kernel(x_ref, w_ref, b_ref, out_ref):
    """One batch tile of the 3-layer MLP.

    x_ref  : (TB, HP)    zero-padded input states
    w_ref  : (3, HP, HP) packed, zero-padded weights, (in, out) layout
    b_ref  : (3, 1, HP)  packed, zero-padded biases
    out_ref: (TB, HP)    zero-padded outputs (lane-dense store)
    """
    x = x_ref[...]                                                    # (TB, HP)

    # Linear1 + ReLU  (padded D rows of w1 are zero, padded x cols are zero)
    h1 = jnp.dot(x, w_ref[0], preferred_element_type=jnp.float32) + b_ref[0]
    h1 = jnp.maximum(h1, 0.0)

    # Linear2 + ReLU
    h2 = jnp.dot(h1, w_ref[1], preferred_element_type=jnp.float32) + b_ref[1]
    h2 = jnp.maximum(h2, 0.0)

    # Softmax over the hidden/feature axis (PyTorch nn.Softmax() applied to the
    # 1-D activation). HP is a multiple of 128 and un-padded, so the reduction
    # is exact.
    m = jnp.max(h2, axis=-1, keepdims=True)
    e = jnp.exp(h2 - m)
    denom = jnp.sum(e, axis=-1, keepdims=True)
    s = e * pl.reciprocal(denom, approx=True)        # EUP vrcp, ~2^-12 rel err

    # Linear3 + Tanh (padded output columns of w3/b3 are zero -> tanh(0)=0,
    # sliced off in the wrapper).
    y = jnp.dot(s, w_ref[2], preferred_element_type=jnp.float32) + b_ref[2]
    out_ref[...] = jnp.tanh(y)


def init_params(key, internal_representation_size, actions_size, reward_size,
                hidden_size=128):
    """Deterministic synthetic parameters; weights stored (in, out)."""
    ks = jax.random.split(key, 6)
    d, h = internal_representation_size, hidden_size
    o = actions_size + reward_size
    s1 = 1.0 / jnp.sqrt(d)
    s2 = 1.0 / jnp.sqrt(h)
    w1 = jax.random.uniform(ks[0], (d, h), jnp.float32, -s1, s1)
    b1 = jax.random.uniform(ks[1], (h,), jnp.float32, -s1, s1)
    w2 = jax.random.uniform(ks[2], (h, h), jnp.float32, -s2, s2)
    b2 = jax.random.uniform(ks[3], (h,), jnp.float32, -s2, s2)
    w3 = jax.random.uniform(ks[4], (h, o), jnp.float32, -s2, s2)
    b3 = jax.random.uniform(ks[5], (o,), jnp.float32, -s2, s2)
    return (w1, b1, w2, b2, w3, b3)


def pack_params(params, internal_representation_size, actions_size, reward_size,
                hidden_size=128):
    """Pack the 6 linear parameters into two zero-padded slabs (done once)."""
    w1, b1, w2, b2, w3, b3 = params
    hp = hidden_size
    d = internal_representation_size
    out_dim = actions_size + reward_size
    assert hp % _LANE == 0, "hidden_size must be a multiple of 128"
    # TODO(synk): tile D / out_dim if they ever exceed the hidden width.
    assert d <= hp and out_dim <= hp

    w_slab = jnp.zeros((3, hp, hp), jnp.float32)
    w_slab = w_slab.at[0, :d, :].set(w1.astype(jnp.float32))
    w_slab = w_slab.at[1].set(w2.astype(jnp.float32))
    w_slab = w_slab.at[2, :, :out_dim].set(w3.astype(jnp.float32))

    b_slab = jnp.zeros((3, 1, hp), jnp.float32)
    b_slab = b_slab.at[0, 0, :].set(b1.reshape(-1).astype(jnp.float32))
    b_slab = b_slab.at[1, 0, :].set(b2.reshape(-1).astype(jnp.float32))
    b_slab = b_slab.at[2, 0, :out_dim].set(b3.reshape(-1).astype(jnp.float32))
    return w_slab, b_slab


@functools.partial(jax.jit,
                   static_argnames=("actions_size", "reward_size", "block_b"))
def rl_prediction_forward(state, w_slab, b_slab, actions_size, reward_size,
                          *, block_b=256):
    """state: (D,) for the original unbatched module semantics, or (B, D).

    Returns (policy, reward): shapes (A,)/(R,) for 1-D input, (B,A)/(B,R) for
    batched input.
    """
    hp = w_slab.shape[-1]
    single = state.ndim == 1
    x = state[None, :] if single else state
    b, d = x.shape
    assert d <= hp
    out_dim = actions_size + reward_size

    # Batch tile: 256 rows (feeds the 256-wide MXU on v6e/v7x; also fine on
    # v5e), shrunk to the next multiple of 8 for tiny batches.
    tb = min(block_b, _round_up(b, 8))
    b_pad = _round_up(b, tb)

    # Pad features to the hidden width and batch to a tile multiple (zeros are
    # inert through the zero-padded weight rows).
    x_pad = jnp.zeros((b_pad, hp), jnp.float32)
    x_pad = x_pad.at[:b, :d].set(x.astype(jnp.float32))

    res = pl.pallas_call(
        _mlp_kernel,
        out_shape=jax.ShapeDtypeStruct((b_pad, hp), jnp.float32),
        grid=(b_pad // tb,),
        in_specs=[
            pl.BlockSpec((tb, hp), lambda i: (i, 0)),       # states tile
            pl.BlockSpec((3, hp, hp), lambda i: (0, 0, 0)),  # weights, resident
            pl.BlockSpec((3, 1, hp), lambda i: (0, 0, 0)),   # biases, resident
        ],
        out_specs=pl.BlockSpec((tb, hp), lambda i: (i, 0)),  # lane-dense store
        compiler_params=pltpu.CompilerParams(
            dimension_semantics=("parallel",)),              # megacore on v7x
    )(x_pad, w_slab, b_slab)

    res = res[:b, :out_dim]
    policy = res[:, :actions_size]
    reward = res[:, out_dim - reward_size:]                  # == res[-R:] per row
    if single:
        return policy[0], reward[0]
    return policy, reward


def _reference(x, params):
    """Pure-JAX reference, batched over rows."""
    w1, b1, w2, b2, w3, b3 = params
    h1 = jnp.maximum(x @ w1 + b1, 0.0)
    h2 = jnp.maximum(h1 @ w2 + b2, 0.0)
    s = jax.nn.softmax(h2, axis=-1)
    return jnp.tanh(s @ w3 + b3)


if __name__ == "__main__":
    internal_representation_size = 32
    actions_size = 8
    reward_size = 4
    hidden_size = 128          # module default; fills the 128-lane vreg exactly
    batch = 512                # -> two 256-row grid tiles

    key = jax.random.PRNGKey(0)
    k_state, k_params = jax.random.split(key)
    params = init_params(k_params, internal_representation_size,
                         actions_size, reward_size, hidden_size)
    w_slab, b_slab = pack_params(params, internal_representation_size,
                                 actions_size, reward_size, hidden_size)

    states = jax.random.normal(
        k_state, (batch, internal_representation_size), jnp.float32)

    # Batched forward.
    policy, reward = rl_prediction_forward(states, w_slab, b_slab,
                                           actions_size, reward_size)
    jax.block_until_ready((policy, reward))
    assert policy.shape == (batch, actions_size)
    assert reward.shape == (batch, reward_size)

    ref = _reference(states, params)
    # Tolerance loosened for the approx (EUP) reciprocal in the softmax.
    assert jnp.allclose(policy, ref[:, :actions_size], atol=1e-3, rtol=1e-3)
    assert jnp.allclose(reward, ref[:, actions_size:], atol=1e-3, rtol=1e-3)

    # Original unbatched module semantics on a single 1-D state.
    p1, r1 = rl_prediction_forward(states[0], w_slab, b_slab,
                                   actions_size, reward_size)
    jax.block_until_ready((p1, r1))
    assert p1.shape == (actions_size,) and r1.shape == (reward_size,)
    assert jnp.allclose(p1, ref[0, :actions_size], atol=1e-3, rtol=1e-3)
    assert jnp.allclose(r1, ref[0, actions_size:], atol=1e-3, rtol=1e-3)

    print("KERNEL_OK")
</pallas_src>

<mosaic_0001>
module attributes {stable_mosaic.version = 11 : i64} {
  func.func @_mlp_kernel(%arg0: i32, %arg1: memref<256x128xf32, #tpu.memory_space<vmem>>, %arg2: memref<3x128x128xf32, #tpu.memory_space<vmem>>, %arg3: memref<3x1x128xf32, #tpu.memory_space<vmem>>, %arg4: memref<256x128xf32, #tpu.memory_space<vmem>>) attributes {dimension_semantics = [#tpu.dimension_semantics<parallel>], iteration_bounds = array<i64: 2>, scalar_prefetch = 0 : i64, scratch_operands = 0 : i64, tpu.core_type = #tpu.core_type<tc>, window_params = [{transform_indices = @transform_0, window_bounds = array<i64: 256, 128>}, {pipeline_mode = #tpu.pipeline_mode<synchronous>, transform_indices = @transform_1, window_bounds = array<i64: 3, 128, 128>}, {pipeline_mode = #tpu.pipeline_mode<synchronous>, transform_indices = @transform_2, window_bounds = array<i64: 3, 1, 128>}, {transform_indices = @transform_3, window_bounds = array<i64: 256, 128>}]} {
    %c0 = arith.constant 0 : index
    %c0_0 = arith.constant 0 : index
    %0 = vector.load %arg1[%c0, %c0_0] : memref<256x128xf32, #tpu.memory_space<vmem>>, vector<256x128xf32>
    %c0_1 = arith.constant 0 : index
    %c0_2 = arith.constant 0 : index
    %c0_3 = arith.constant 0 : index
    %1 = vector.load %arg2[%c0_1, %c0_2, %c0_3] : memref<3x128x128xf32, #tpu.memory_space<vmem>>, vector<1x128x128xf32>
    %2 = vector.shape_cast %1 : vector<1x128x128xf32> to vector<128x128xf32>
    %cst = arith.constant dense<0.000000e+00> : vector<256x128xf32>
    %3 = tpu.matmul %0, %2, %cst {dimension_numbers = #tpu.dot_dimension_numbers<[1], [0], [0], [1], [0, 0, 1, 1], [], []>} : vector<256x128xf32>, vector<128x128xf32>, vector<256x128xf32> -> vector<256x128xf32>
    %c0_4 = arith.constant 0 : index
    %c0_5 = arith.constant 0 : index
    %c0_6 = arith.constant 0 : index
    %4 = vector.load %arg3[%c0_4, %c0_5, %c0_6] : memref<3x1x128xf32, #tpu.memory_space<vmem>>, vector<1x1x128xf32>
    %5 = vector.shape_cast %4 : vector<1x1x128xf32> to vector<1x128xf32>
    %6 = vector.broadcast %5 : vector<1x128xf32> to vector<256x128xf32>
    %7 = arith.addf %3, %6 : vector<256x128xf32>
    %cst_7 = arith.constant 0.000000e+00 : f32
    %8 = vector.broadcast %cst_7 : f32 to vector<256x128xf32>
    %9 = arith.maximumf %7, %8 : vector<256x128xf32>
    %c1 = arith.constant 1 : index
    %c0_8 = arith.constant 0 : index
    %c0_9 = arith.constant 0 : index
    %10 = vector.load %arg2[%c1, %c0_8, %c0_9] : memref<3x128x128xf32, #tpu.memory_space<vmem>>, vector<1x128x128xf32>
    %11 = vector.shape_cast %10 : vector<1x128x128xf32> to vector<128x128xf32>
    %cst_10 = arith.constant dense<0.000000e+00> : vector<256x128xf32>
    %12 = tpu.matmul %9, %11, %cst_10 {dimension_numbers = #tpu.dot_dimension_numbers<[1], [0], [0], [1], [0, 0, 1, 1], [], []>} : vector<256x128xf32>, vector<128x128xf32>, vector<256x128xf32> -> vector<256x128xf32>
    %c1_11 = arith.constant 1 : index
    %c0_12 = arith.constant 0 : index
    %c0_13 = arith.constant 0 : index
    %13 = vector.load %arg3[%c1_11, %c0_12, %c0_13] : memref<3x1x128xf32, #tpu.memory_space<vmem>>, vector<1x1x128xf32>
    %14 = vector.shape_cast %13 : vector<1x1x128xf32> to vector<1x128xf32>
    %15 = vector.broadcast %14 : vector<1x128xf32> to vector<256x128xf32>
    %16 = arith.addf %12, %15 : vector<256x128xf32>
    %cst_14 = arith.constant 0.000000e+00 : f32
    %17 = vector.broadcast %cst_14 : f32 to vector<256x128xf32>
    %18 = arith.maximumf %16, %17 : vector<256x128xf32>
    %cst_15 = arith.constant dense<0xFF800000> : vector<256xf32>
    %19 = vector.multi_reduction <maximumf>, %18, %cst_15 [1] : vector<256x128xf32> to vector<256xf32>
    %20 = vector.shape_cast %19 : vector<256xf32> to vector<256x1xf32>
    %21 = vector.broadcast %20 : vector<256x1xf32> to vector<256x128xf32>
    %22 = arith.subf %18, %21 : vector<256x128xf32>
    %23 = math.exp %22 : vector<256x128xf32>
    %cst_16 = arith.constant dense<0.000000e+00> : vector<256xf32>
    %24 = vector.multi_reduction <add>, %23, %cst_16 [1] : vector<256x128xf32> to vector<256xf32>
    %25 = vector.shape_cast %24 : vector<256xf32> to vector<256x1xf32>
    %26 = tpu.reciprocal %25 {approx = true} : vector<256x1xf32> -> vector<256x1xf32>
    %27 = vector.broadcast %26 : vector<256x1xf32> to vector<256x128xf32>
    %28 = arith.mulf %23, %27 : vector<256x128xf32>
    %c2 = arith.constant 2 : index
    %c0_17 = arith.constant 0 : index
    %c0_18 = arith.constant 0 : index
    %29 = vector.load %arg2[%c2, %c0_17, %c0_18] : memref<3x128x128xf32, #tpu.memory_space<vmem>>, vector<1x128x128xf32>
    %30 = vector.shape_cast %29 : vector<1x128x128xf32> to vector<128x128xf32>
    %cst_19 = arith.constant dense<0.000000e+00> : vector<256x128xf32>
    %31 = tpu.matmul %28, %30, %cst_19 {dimension_numbers = #tpu.dot_dimension_numbers<[1], [0], [0], [1], [0, 0, 1, 1], [], []>} : vector<256x128xf32>, vector<128x128xf32>, vector<256x128xf32> -> vector<256x128xf32>
    %c2_20 = arith.constant 2 : index
    %c0_21 = arith.constant 0 : index
    %c0_22 = arith.constant 0 : index
    %32 = vector.load %arg3[%c2_20, %c0_21, %c0_22] : memref<3x1x128xf32, #tpu.memory_space<vmem>>, vector<1x1x128xf32>
    %33 = vector.shape_cast %32 : vector<1x1x128xf32> to vector<1x128xf32>
    %34 = vector.broadcast %33 : vector<1x128xf32> to vector<256x128xf32>
    %35 = arith.addf %31, %34 : vector<256x128xf32>
    %36 = math.tanh %35 : vector<256x128xf32>
    %c0_23 = arith.constant 0 : index
    %c0_24 = arith.constant 0 : index
    %37 = vector.load %arg4[%c0_23, %c0_24] : memref<256x128xf32, #tpu.memory_space<vmem>>, vector<256x128xf32>
    tpu.vector_store %arg4[%c0_23, %c0_24], %36 {strides = array<i32>} : memref<256x128xf32, #tpu.memory_space<vmem>>, vector<256x128xf32>,
    return
  }
  func.func @transform_0(%arg0: i32) -> (i32, i32) {
    %c0_i32 = arith.constant 0 : i32
    %c0_i32_0 = arith.constant 0 : i32
    return %arg0, %c0_i32 : i32, i32
  }
  func.func @transform_1(%arg0: i32) -> (i32, i32, i32) {
    %c0_i32 = arith.constant 0 : i32
    %c0_i32_0 = arith.constant 0 : i32
    %c0_i32_1 = arith.constant 0 : i32
    %c0_i32_2 = arith.constant 0 : i32
    return %c0_i32, %c0_i32_0, %c0_i32_1 : i32, i32, i32
  }
  func.func @transform_2(%arg0: i32) -> (i32, i32, i32) {
    %c0_i32 = arith.constant 0 : i32
    %c0_i32_0 = arith.constant 0 : i32
    %c0_i32_1 = arith.constant 0 : i32
    %c0_i32_2 = arith.constant 0 : i32
    return %c0_i32, %c0_i32_0, %c0_i32_1 : i32, i32, i32
  }
  func.func @transform_3(%arg0: i32) -> (i32, i32) {
    %c0_i32 = arith.constant 0 : i32
    %c0_i32_0 = arith.constant 0 : i32
    return %arg0, %c0_i32 : i32, i32
  }
}

</mosaic_0001>

<llo_original>
// kernel: rl_prediction_forward.1
$region0: #{rl_prediction_forward.1}
  #allocation0 [shape = 'u32[]', space=smem, size = 0x4, offset = 0x4, fixed_abs, tag = 'smem constant byte address 0x4 - core index']
  #allocation1 [shape = 'u32[72,128]{1,0:T(1,128)}', space=vmem, size = 0x9000, scoped, tag = 'internal scratch']
  %s0 = inlined_call_operand.vmem [shape: f32[512,128], index: 0, kind: input, shape index: {}]
  %s1 = inlined_call_operand.vmem [shape: f32[3,128,128], index: 1, kind: input, shape index: {}]
  %s2 = inlined_call_operand.vmem [shape: f32[3,1,128], index: 2, kind: input, shape index: {}]
  %s3 = inlined_call_operand.vmem [shape: f32[512,128], index: 3, kind: output, shape index: {}]
  %s4 = sld [smem:[#allocation0]]
  $region45: #{rl_prediction_forward.1} parent=0
    _
  %s6 = ssub.s32 1, %s4
  %s7 = scalar_select 0, %s6, %s4
  loop: start=0, step=1, limit=4
  $region2: #{rl_prediction_forward.1} parent=0 // loop_pre_header
    _
  $region3: #{rl_prediction_forward.1} parent=0 // loop_header
    %s9 = sphi 0, %s13
    %p10 = scmp.ge.s32.totalorder %s9, 4
    %s19 = sphi 0, %s21
    %s22 = sphi 0, %s19
    %s23 = sphi 0, %s22
    %s39 = sphi 0, %s23
    %s43 = sphi 0, %s43
    %s45 = sphi 0, %s43
    %s46 = sphi 0, %s45
    %s60 = sphi 0, %s46
    %s64 = sphi 0, %s64
    %s66 = sphi 0, %s64
    %s67 = sphi 0, %s66
    %s81 = sphi 0, %s67
    %s87 = sphi 0, %s89
    %s90 = sphi 0, %s87
    %s91 = sphi 0, %s90
    %s107 = sphi 0, %s91
  $region4: #{rl_prediction_forward.1} parent=0 // loop_header_branch
    %12 = sbr.rel (%p10) target = $region8
  $region5: #{rl_prediction_forward.1} parent=0 // loop_body
    %s14 = ssub.s32 %s9, 1
    %s15 = ssub.s32 %s9, 2
    %s16 = sadd.s32 %s9, 1
    %s17 = ssub.s32 %s9, %s16
    %p18 = scmp.eq.s32.totalorder %s17, 0
    %s20 = sadd.s32 %s19, 1
    %s21 = scalar_select %p18, %s19, %s20
    %p24 = pneg %p18
    %p25 = scmp.eq.s32.totalorder %s9, 1
    %p26 = por %p24, %p25
    %p27 = scmp.ne.s32.totalorder %s19, %s22
    %p28 = scmp.eq.s32.totalorder %s9, 0
    %p29 = por %p27, %p28
    %p30 = scmp.ne.s32.totalorder %s19, %s22
    %p31 = scmp.eq.s32.totalorder %s14, 1
    %p32 = por %p30, %p31
    %p33 = scmp.ne.s32.totalorder %s22, %s23
    %p34 = scmp.eq.s32.totalorder %s14, 0
    %p35 = por %p33, %p34
    %p36 = scmp.ne.s32.totalorder %s22, %s23
    %p37 = scmp.eq.s32.totalorder %s15, 1
    %p38 = por %p36, %p37
    %p40 = scmp.ne.s32.totalorder %s23, %s39
    %p41 = scmp.eq.s32.totalorder %s15, 0
    %p42 = por %p40, %p41
    %s44 = sadd.s32 %s43, 1
    %p47 = scmp.eq.s32.totalorder %s9, 1
    %p48 = scmp.ne.s32.totalorder %s43, %s45
    %p49 = scmp.eq.s32.totalorder %s9, 0
    %p50 = por %p48, %p49
    %p51 = scmp.ne.s32.totalorder %s43, %s45
    %p52 = scmp.eq.s32.totalorder %s14, 1
    %p53 = por %p51, %p52
    %p54 = scmp.ne.s32.totalorder %s45, %s46
    %p55 = scmp.eq.s32.totalorder %s14, 0
    %p56 = por %p54, %p55
    %p57 = scmp.ne.s32.totalorder %s45, %s46
    %p58 = scmp.eq.s32.totalorder %s15, 1
    %p59 = por %p57, %p58
    %p61 = scmp.ne.s32.totalorder %s46, %s60
    %p62 = scmp.eq.s32.totalorder %s15, 0
    %p63 = por %p61, %p62
    %s65 = sadd.s32 %s64, 1
    %p68 = scmp.eq.s32.totalorder %s9, 1
    %p69 = scmp.ne.s32.totalorder %s64, %s66
    %p70 = scmp.eq.s32.totalorder %s9, 0
    %p71 = por %p69, %p70
    %p72 = scmp.ne.s32.totalorder %s64, %s66
    %p73 = scmp.eq.s32.totalorder %s14, 1
    %p74 = por %p72, %p73
    %p75 = scmp.ne.s32.totalorder %s66, %s67
    %p76 = scmp.eq.s32.totalorder %s14, 0
    %p77 = por %p75, %p76
    %p78 = scmp.ne.s32.totalorder %s66, %s67
    %p79 = scmp.eq.s32.totalorder %s15, 1
    %p80 = por %p78, %p79
    %p82 = scmp.ne.s32.totalorder %s67, %s81
    %p83 = scmp.eq.s32.totalorder %s15, 0
    %p84 = por %p82, %p83
    %s85 = ssub.s32 %s9, %s16
    %p86 = scmp.eq.s32.totalorder %s85, 0
    %s88 = sadd.s32 %s87, 1
    %s89 = scalar_select %p86, %s87, %s88
    %p92 = pneg %p86
    %p93 = scmp.eq.s32.totalorder %s9, 1
    %p94 = por %p92, %p93
    %p95 = scmp.ne.s32.totalorder %s87, %s90
    %p96 = scmp.eq.s32.totalorder %s9, 0
    %p97 = por %p95, %p96
    %p98 = scmp.ne.s32.totalorder %s87, %s90
    %p99 = scmp.eq.s32.totalorder %s14, 1
    %p100 = por %p98, %p99
    %p101 = scmp.ne.s32.totalorder %s90, %s91
    %p102 = scmp.eq.s32.totalorder %s14, 0
    %p103 = por %p101, %p102
    %p104 = scmp.ne.s32.totalorder %s90, %s91
    %p105 = scmp.eq.s32.totalorder %s15, 1
    %p106 = por %p104, %p105
    %p108 = scmp.ne.s32.totalorder %s91, %s107
    %p109 = scmp.eq.s32.totalorder %s15, 0
    %p110 = por %p108, %p109
    %p111 = scmp.le.s32.totalorder 1, %s9
    %p112 = scmp.lt.s32.totalorder %s9, 3
    %p113 = pnand %p111, %p112
    %p114 = pneg %p113
    // Predicated region
    $region9: #{rl_prediction_forward.1} parent=5 // pred_check
      _
    $region10: #{rl_prediction_forward.1} parent=5 // pred_check_branch
      %116 = sbr.rel (%p113) target = $region12
    $region11: #{rl_prediction_forward.1} parent=5 // pred_region
      %s117 = ssub.s32 %s9, 1
      // Predicated region
      $region13: #{rl_prediction_forward.1} parent=11 // pred_check
        %p118 = pneg %p56
      $region14: #{rl_prediction_forward.1} parent=11 // pred_check_branch
        %120 = sbr.rel (%p118) target = $region16
      $region15: #{rl_prediction_forward.1} parent=11 // pred_region
        _
      $region16: #{rl_prediction_forward.1} parent=11 // pred_fallthru
        _
      // Predicated region
      $region17: #{rl_prediction_forward.1} parent=11 // pred_check
        %p121 = pneg %p77
      $region18: #{rl_prediction_forward.1} parent=11 // pred_check_branch
        %123 = sbr.rel (%p121) target = $region20
      $region19: #{rl_prediction_forward.1} parent=11 // pred_region
        _
      $region20: #{rl_prediction_forward.1} parent=11 // pred_fallthru
        _
    $region12: #{rl_prediction_forward.1} parent=5 // pred_fallthru
      _
    %p124 = scmp.lt.s32.totalorder %s9, 2
    // Predicated region
    $region21: #{rl_prediction_forward.1} parent=5 // pred_check
      %p125 = pneg %p124
    $region22: #{rl_prediction_forward.1} parent=5 // pred_check_branch
      %127 = sbr.rel (%p125) target = $region24
    $region23: #{rl_prediction_forward.1} parent=5 // pred_region
      // Predicated region
      $region25: #{rl_prediction_forward.1} parent=23 // pred_check
        %p128 = pneg %p29
      $region26: #{rl_prediction_forward.1} parent=23 // pred_check_branch
        %130 = sbr.rel (%p128) target = $region28
      $region27: #{rl_prediction_forward.1} parent=23 // pred_region
        %s131 = smul.u32 32, %s9
        %p132 = scmp.lt.s32.totalorder %s131, 63
        %s133 = scalar_select %p132, %s131, 63
        %s134 = smul.addr %s133, 8
        %s135 = scalar_lea.vmem %s0, %s134
        %s136 = smul.u32 32, %s9
      $region28: #{rl_prediction_forward.1} parent=23 // pred_fallthru
        _
    $region24: #{rl_prediction_forward.1} parent=5 // pred_fallthru
      _
    %p137 = scmp.le.s32.totalorder 1, %s9
    %p138 = scmp.lt.s32.totalorder %s9, 3
    %p139 = pnand %p137, %p138
    %p140 = pneg %p139
    // Predicated region
    $region29: #{rl_prediction_forward.1} parent=5 // pred_check
      _
    $region30: #{rl_prediction_forward.1} parent=5 // pred_check_branch
      %142 = sbr.rel (%p139) target = $region32
    $region31: #{rl_prediction_forward.1} parent=5 // pred_region
      %s143 = ssub.s32 %s9, 1
      %s144 = smul.u32 32, %s14
      %p145 = scmp.lt.s32.totalorder %s144, 63
      %s146 = scalar_select %p145, %s144, 63
      %s147 = smul.addr %s146, 8
      %s148 = scalar_lea.vmem %s0, %s147
      %p149 = pneg %p35
      %p150 = pneg %p32
      %p151 = pneg %p56
      %p152 = pneg %p53
      %p153 = pneg %p77
      %p154 = pneg %p74
      %p155 = pneg %p103
      %p156 = pneg %p100
      %s157 = smul.u32 32, %s14
      %p158 = scmp.lt.s32.totalorder %s157, 63
      %s159 = scalar_select %p158, %s157, 63
      %s160 = smul.addr %s159, 8
      %s161 = scalar_lea.vmem %s3, %s160
      %s162 = smul.u32 32, %s14
      %p163 = scmp.lt.s32.totalorder %s162, 63
      %s164 = scalar_select %p163, %s162, 63
      %s165 = smul.addr %s164, 8
      %s166 = scalar_lea.vmem %s0, %s165
      %s167 = smul.u32 32, %s14
      %s168 = smul.u32 32, %s14
      %p169 = scmp.lt.s32.totalorder %s168, 63
      %s170 = scalar_select %p169, %s168, 63
      %s171 = smul.addr %s170, 8
      %s172 = scalar_lea.vmem %s3, %s171
      %s173 = smul.u32 32, %s14
      %v174 = vld [vmem:[%s166] sm:$0xff]
      %v175 = vld [vmem:[%s166 + $0x8] sm:$0xff]
      %v176 = vld [vmem:[%s166 + $0x10] sm:$0xff]
      %v177 = vld [vmem:[%s166 + $0x18] sm:$0xff]
      %v178 = vld [vmem:[%s166 + $0x20] sm:$0xff]
      %v179 = vld [vmem:[%s166 + $0x28] sm:$0xff]
      %v180 = vld [vmem:[%s166 + $0x30] sm:$0xff]
      %v181 = vld [vmem:[%s166 + $0x38] sm:$0xff]
      %v182 = vld [vmem:[%s166 + $0x40] sm:$0xff]
      %v183 = vld [vmem:[%s166 + $0x48] sm:$0xff]
      %v184 = vld [vmem:[%s166 + $0x50] sm:$0xff]
      %v185 = vld [vmem:[%s166 + $0x58] sm:$0xff]
      %v186 = vld [vmem:[%s166 + $0x60] sm:$0xff]
      %v187 = vld [vmem:[%s166 + $0x68] sm:$0xff]
      %v188 = vld [vmem:[%s166 + $0x70] sm:$0xff]
      %v189 = vld [vmem:[%s166 + $0x78] sm:$0xff]
      %v190 = vld [vmem:[%s166 + $0x80] sm:$0xff]
      %v191 = vld [vmem:[%s166 + $0x88] sm:$0xff]
      %v192 = vld [vmem:[%s166 + $0x90] sm:$0xff]
      %v193 = vld [vmem:[%s166 + $0x98] sm:$0xff]
      %v194 = vld [vmem:[%s166 + $0xa0] sm:$0xff]
      %v195 = vld [vmem:[%s166 + $0xa8] sm:$0xff]
      %v196 = vld [vmem:[%s166 + $0xb0] sm:$0xff]
      %v197 = vld [vmem:[%s166 + $0xb8] sm:$0xff]
      %v198 = vld [vmem:[%s166 + $0xc0] sm:$0xff]
      %v199 = vld [vmem:[%s166 + $0xc8] sm:$0xff]
      %v200 = vld [vmem:[%s166 + $0xd0] sm:$0xff]
      %v201 = vld [vmem:[%s166 + $0xd8] sm:$0xff]
      %v202 = vld [vmem:[%s166 + $0xe0] sm:$0xff]
      %v203 = vld [vmem:[%s166 + $0xe8] sm:$0xff]
      %v204 = vld [vmem:[%s166 + $0xf0] sm:$0xff]
      %v205 = vld [vmem:[%s166 + $0xf8] sm:$0xff]
      %v206 = vld [vmem:[%s1] sm:$0xff]
      %v207 = vld [vmem:[%s1 + $0x8] sm:$0xff]
      %v208 = vld [vmem:[%s1 + $0x10] sm:$0xff]
      %v209 = vld [vmem:[%s1 + $0x18] sm:$0xff]
      %v210 = vld [vmem:[%s1 + $0x20] sm:$0xff]
      %v211 = vld [vmem:[%s1 + $0x28] sm:$0xff]
      %v212 = vld [vmem:[%s1 + $0x30] sm:$0xff]
      %v213 = vld [vmem:[%s1 + $0x38] sm:$0xff]
      %v214 = vld [vmem:[%s1 + $0x40] sm:$0xff]
      %v215 = vld [vmem:[%s1 + $0x48] sm:$0xff]
      %v216 = vld [vmem:[%s1 + $0x50] sm:$0xff]
      %v217 = vld [vmem:[%s1 + $0x58] sm:$0xff]
      %v218 = vld [vmem:[%s1 + $0x60] sm:$0xff]
      %v219 = vld [vmem:[%s1 + $0x68] sm:$0xff]
      %v220 = vld [vmem:[%s1 + $0x70] sm:$0xff]
      %v221 = vld [vmem:[%s1 + $0x78] sm:$0xff]
      %v222 = vld [vmem:[%s2] sm:$0x1]
      %v224 = vperm.slane %v222, 0
      %226 = vmatpush.msra.mxu0 %v221
      %227 = vmatpush.msra.mxu0 %v220
      %228 = vmatpush.msra.mxu0 %v219
      %229 = vmatpush.msra.mxu0 %v218
      %230 = vmatpush.msra.mxu0 %v217
      %231 = vmatpush.msra.mxu0 %v216
      %232 = vmatpush.msra.mxu0 %v215
      %233 = vmatpush.msra.mxu0 %v214
      %234 = vmatpush.msra.mxu0 %v213
      %235 = vmatpush.msra.mxu0 %v212
      %236 = vmatpush.msra.mxu0 %v211
      %237 = vmatpush.msra.mxu0 %v210
      %238 = vmatpush.msra.mxu0 %v209
      %239 = vmatpush.msra.mxu0 %v208
      %240 = vmatpush.msra.mxu0 %v207
      %241 = vmatpush.msra.mxu0 %v206
      %242 = vmatmul.f32.gmra.mxu0 %v174
      %v243 = vpop.f32.mrf.mxu0
      %v244 = vadd.f32 %v224, %v243
      %245 = vmatmul.f32.gmra.mxu0 %v175
      %v246 = vpop.f32.mrf.mxu0
      %v247 = vadd.f32 %v224, %v246
      %248 = vmatmul.f32.gmra.mxu0 %v176
      %v249 = vpop.f32.mrf.mxu0
      %v250 = vadd.f32 %v224, %v249
      %251 = vmatmul.f32.gmra.mxu0 %v177
      %v252 = vpop.f32.mrf.mxu0
      %v253 = vadd.f32 %v224, %v252
      %254 = vmatmul.f32.gmra.mxu0 %v178
      %v255 = vpop.f32.mrf.mxu0
      %v256 = vadd.f32 %v224, %v255
      %257 = vmatmul.f32.gmra.mxu0 %v179
      %v258 = vpop.f32.mrf.mxu0
      %v259 = vadd.f32 %v224, %v258
      %260 = vmatmul.f32.gmra.mxu0 %v180
      %v261 = vpop.f32.mrf.mxu0
      %v262 = vadd.f32 %v224, %v261
      %263 = vmatmul.f32.gmra.mxu0 %v181
      %v264 = vpop.f32.mrf.mxu0
      %v265 = vadd.f32 %v224, %v264
      %266 = vmatmul.f32.gmra.mxu0 %v182
      %v267 = vpop.f32.mrf.mxu0
      %v268 = vadd.f32 %v224, %v267
      %269 = vmatmul.f32.gmra.mxu0 %v183
      %v270 = vpop.f32.mrf.mxu0
      %v271 = vadd.f32 %v224, %v270
      %272 = vmatmul.f32.gmra.mxu0 %v184
      %v273 = vpop.f32.mrf.mxu0
      %v274 = vadd.f32 %v224, %v273
      %275 = vmatmul.f32.gmra.mxu0 %v185
      %v276 = vpop.f32.mrf.mxu0
      %v277 = vadd.f32 %v224, %v276
      %278 = vmatmul.f32.gmra.mxu0 %v186
      %v279 = vpop.f32.mrf.mxu0
      %v280 = vadd.f32 %v224, %v279
      %281 = vmatmul.f32.gmra.mxu0 %v187
      %v282 = vpop.f32.mrf.mxu0
      %v283 = vadd.f32 %v224, %v282
      %284 = vmatmul.f32.gmra.mxu0 %v188
      %v285 = vpop.f32.mrf.mxu0
      %v286 = vadd.f32 %v224, %v285
      %287 = vmatmul.f32.gmra.mxu0 %v189
      %v288 = vpop.f32.mrf.mxu0
      %v289 = vadd.f32 %v224, %v288
      %290 = vmatmul.f32.gmra.mxu0 %v190
      %v291 = vpop.f32.mrf.mxu0
      %v292 = vadd.f32 %v224, %v291
      %293 = vmatmul.f32.gmra.mxu0 %v191
      %v294 = vpop.f32.mrf.mxu0
      %v295 = vadd.f32 %v224, %v294
      %296 = vmatmul.f32.gmra.mxu0 %v192
      %v297 = vpop.f32.mrf.mxu0
      %v298 = vadd.f32 %v224, %v297
      %299 = vmatmul.f32.gmra.mxu0 %v193
      %v300 = vpop.f32.mrf.mxu0
      %v301 = vadd.f32 %v224, %v300
      %302 = vmatmul.f32.gmra.mxu0 %v194
      %v303 = vpop.f32.mrf.mxu0
      %v304 = vadd.f32 %v224, %v303
      %305 = vmatmul.f32.gmra.mxu0 %v195
      %v306 = vpop.f32.mrf.mxu0
      %v307 = vadd.f32 %v224, %v306
      %308 = vmatmul.f32.gmra.mxu0 %v196
      %v309 = vpop.f32.mrf.mxu0
      %v310 = vadd.f32 %v224, %v309
      %311 = vmatmul.f32.gmra.mxu0 %v197
      %v312 = vpop.f32.mrf.mxu0
      %v313 = vadd.f32 %v224, %v312
      %314 = vmatmul.f32.gmra.mxu0 %v198
      %v315 = vpop.f32.mrf.mxu0
      %v316 = vadd.f32 %v224, %v315
      %317 = vmatmul.f32.gmra.mxu0 %v199
      %v318 = vpop.f32.mrf.mxu0
      %v319 = vadd.f32 %v224, %v318
      %320 = vmatmul.f32.gmra.mxu0 %v200
      %v321 = vpop.f32.mrf.mxu0
      %v322 = vadd.f32 %v224, %v321
      %323 = vmatmul.f32.gmra.mxu0 %v201
      %v324 = vpop.f32.mrf.mxu0
      %v325 = vadd.f32 %v224, %v324
      %326 = vmatmul.f32.gmra.mxu0 %v202
      %v327 = vpop.f32.mrf.mxu0
      %v328 = vadd.f32 %v224, %v327
      %329 = vmatmul.f32.gmra.mxu0 %v203
      %v330 = vpop.f32.mrf.mxu0
      %v331 = vadd.f32 %v224, %v330
      %332 = vmatmul.f32.gmra.mxu0 %v204
      %v333 = vpop.f32.mrf.mxu0
      %v334 = vadd.f32 %v224, %v333
      %335 = vmatmul.f32.gmra.mxu0 %v205
      %v336 = vpop.f32.mrf.mxu0
      %v337 = vadd.f32 %v224, %v336
      %338 = vdwg.mxu0
      %v339 = vmax.f32 %v244, 0.0
      %v340 = vmax.f32 %v247, 0.0
      %v341 = vmax.f32 %v250, 0.0
      %v342 = vmax.f32 %v253, 0.0
      %v343 = vmax.f32 %v256, 0.0
      %v344 = vmax.f32 %v259, 0.0
      %v345 = vmax.f32 %v262, 0.0
      %v346 = vmax.f32 %v265, 0.0
      %v347 = vmax.f32 %v268, 0.0
      %v348 = vmax.f32 %v271, 0.0
      %v349 = vmax.f32 %v274, 0.0
      %v350 = vmax.f32 %v277, 0.0
      %v351 = vmax.f32 %v280, 0.0
      %v352 = vmax.f32 %v283, 0.0
      %v353 = vmax.f32 %v286, 0.0
      %v354 = vmax.f32 %v289, 0.0
      %v355 = vmax.f32 %v292, 0.0
      %v356 = vmax.f32 %v295, 0.0
      %v357 = vmax.f32 %v298, 0.0
      %v358 = vmax.f32 %v301, 0.0
      %v359 = vmax.f32 %v304, 0.0
      %v360 = vmax.f32 %v307, 0.0
      %v361 = vmax.f32 %v310, 0.0
      %v362 = vmax.f32 %v313, 0.0
      %v363 = vmax.f32 %v316, 0.0
      %v364 = vmax.f32 %v319, 0.0
      %v365 = vmax.f32 %v322, 0.0
      %v366 = vmax.f32 %v325, 0.0
      %v367 = vmax.f32 %v328, 0.0
      %v368 = vmax.f32 %v331, 0.0
      %v369 = vmax.f32 %v334, 0.0
      %v370 = vmax.f32 %v337, 0.0
      %s371 = scalar_lea.vmem %s1, 128
      %v372 = vld [vmem:[%s371] sm:$0xff]
      %v373 = vld [vmem:[%s371 + $0x8] sm:$0xff]
      %v374 = vld [vmem:[%s371 + $0x10] sm:$0xff]
      %v375 = vld [vmem:[%s371 + $0x18] sm:$0xff]
      %v376 = vld [vmem:[%s371 + $0x20] sm:$0xff]
      %v377 = vld [vmem:[%s371 + $0x28] sm:$0xff]
      %v378 = vld [vmem:[%s371 + $0x30] sm:$0xff]
      %v379 = vld [vmem:[%s371 + $0x38] sm:$0xff]
      %v380 = vld [vmem:[%s371 + $0x40] sm:$0xff]
      %v381 = vld [vmem:[%s371 + $0x48] sm:$0xff]
      %v382 = vld [vmem:[%s371 + $0x50] sm:$0xff]
      %v383 = vld [vmem:[%s371 + $0x58] sm:$0xff]
      %v384 = vld [vmem:[%s371 + $0x60] sm:$0xff]
      %v385 = vld [vmem:[%s371 + $0x68] sm:$0xff]
      %v386 = vld [vmem:[%s371 + $0x70] sm:$0xff]
      %v387 = vld [vmem:[%s371 + $0x78] sm:$0xff]
      %s388 = scalar_lea.vmem %s2, 1
      %v389 = vld [vmem:[%s388] sm:$0x1]
      %v391 = vperm.slane %v389, 0
      %393 = vmatpush.msra.mxu0 %v387
      %394 = vmatpush.msra.mxu0 %v386
      %395 = vmatpush.msra.mxu0 %v385
      %396 = vmatpush.msra.mxu0 %v384
      %397 = vmatpush.msra.mxu0 %v383
      %398 = vmatpush.msra.mxu0 %v382
      %399 = vmatpush.msra.mxu0 %v381
      %400 = vmatpush.msra.mxu0 %v380
      %401 = vmatpush.msra.mxu0 %v379
      %402 = vmatpush.msra.mxu0 %v378
      %403 = vmatpush.msra.mxu0 %v377
      %404 = vmatpush.msra.mxu0 %v376
      %405 = vmatpush.msra.mxu0 %v375
      %406 = vmatpush.msra.mxu0 %v374
      %407 = vmatpush.msra.mxu0 %v373
      %408 = vmatpush.msra.mxu0 %v372
      %409 = vmatmul.f32.gmra.mxu0 %v339
      %v410 = vpop.f32.mrf.mxu0
      %v411 = vadd.f32 %v391, %v410
      %412 = vmatmul.f32.gmra.mxu0 %v340
      %v413 = vpop.f32.mrf.mxu0
      %v414 = vadd.f32 %v391, %v413
      %415 = vmatmul.f32.gmra.mxu0 %v341
      %v416 = vpop.f32.mrf.mxu0
      %v417 = vadd.f32 %v391, %v416
      %418 = vmatmul.f32.gmra.mxu0 %v342
      %v419 = vpop.f32.mrf.mxu0
      %v420 = vadd.f32 %v391, %v419
      %421 = vmatmul.f32.gmra.mxu0 %v343
      %v422 = vpop.f32.mrf.mxu0
      %v423 = vadd.f32 %v391, %v422
      %424 = vmatmul.f32.gmra.mxu0 %v344
      %v425 = vpop.f32.mrf.mxu0
      %v426 = vadd.f32 %v391, %v425
      %427 = vmatmul.f32.gmra.mxu0 %v345
      %v428 = vpop.f32.mrf.mxu0
      %v429 = vadd.f32 %v391, %v428
      %430 = vmatmul.f32.gmra.mxu0 %v346
      %v431 = vpop.f32.mrf.mxu0
      %v432 = vadd.f32 %v391, %v431
      %433 = vmatmul.f32.gmra.mxu0 %v347
      %v434 = vpop.f32.mrf.mxu0
      %v435 = vadd.f32 %v391, %v434
      %436 = vmatmul.f32.gmra.mxu0 %v348
      %v437 = vpop.f32.mrf.mxu0
      %v438 = vadd.f32 %v391, %v437
      %439 = vmatmul.f32.gmra.mxu0 %v349
      %v440 = vpop.f32.mrf.mxu0
      %v441 = vadd.f32 %v391, %v440
      %442 = vmatmul.f32.gmra.mxu0 %v350
      %v443 = vpop.f32.mrf.mxu0
      %v444 = vadd.f32 %v391, %v443
      %445 = vmatmul.f32.gmra.mxu0 %v351
      %v446 = vpop.f32.mrf.mxu0
      %v447 = vadd.f32 %v391, %v446
      %448 = vmatmul.f32.gmra.mxu0 %v352
      %v449 = vpop.f32.mrf.mxu0
      %v450 = vadd.f32 %v391, %v449
      %451 = vmatmul.f32.gmra.mxu0 %v353
      %v452 = vpop.f32.mrf.mxu0
      %v453 = vadd.f32 %v391, %v452
      %454 = vmatmul.f32.gmra.mxu0 %v354
      %v455 = vpop.f32.mrf.mxu0
      %v456 = vadd.f32 %v391, %v455
      %457 = vmatmul.f32.gmra.mxu0 %v355
      %v458 = vpop.f32.mrf.mxu0
      %v459 = vadd.f32 %v391, %v458
      %460 = vmatmul.f32.gmra.mxu0 %v356
      %v461 = vpop.f32.mrf.mxu0
      %v462 = vadd.f32 %v391, %v461
      %463 = vmatmul.f32.gmra.mxu0 %v357
      %v464 = vpop.f32.mrf.mxu0
      %v465 = vadd.f32 %v391, %v464
      %466 = vmatmul.f32.gmra.mxu0 %v358
      %v467 = vpop.f32.mrf.mxu0
      %v468 = vadd.f32 %v391, %v467
      %469 = vmatmul.f32.gmra.mxu0 %v359
      %v470 = vpop.f32.mrf.mxu0
      %v471 = vadd.f32 %v391, %v470
      %472 = vmatmul.f32.gmra.mxu0 %v360
      %v473 = vpop.f32.mrf.mxu0
      %v474 = vadd.f32 %v391, %v473
      %475 = vmatmul.f32.gmra.mxu0 %v361
      %v476 = vpop.f32.mrf.mxu0
      %v477 = vadd.f32 %v391, %v476
      %478 = vmatmul.f32.gmra.mxu0 %v362
      %v479 = vpop.f32.mrf.mxu0
      %v480 = vadd.f32 %v391, %v479
      %481 = vmatmul.f32.gmra.mxu0 %v363
      %v482 = vpop.f32.mrf.mxu0
      %v483 = vadd.f32 %v391, %v482
      %484 = vmatmul.f32.gmra.mxu0 %v364
      %v485 = vpop.f32.mrf.mxu0
      %v486 = vadd.f32 %v391, %v485
      %487 = vmatmul.f32.gmra.mxu0 %v365
      %v488 = vpop.f32.mrf.mxu0
      %v489 = vadd.f32 %v391, %v488
      %490 = vmatmul.f32.gmra.mxu0 %v366
      %v491 = vpop.f32.mrf.mxu0
      %v492 = vadd.f32 %v391, %v491
      %493 = vmatmul.f32.gmra.mxu0 %v367
      %v494 = vpop.f32.mrf.mxu0
      %v495 = vadd.f32 %v391, %v494
      %496 = vmatmul.f32.gmra.mxu0 %v368
      %v497 = vpop.f32.mrf.mxu0
      %v498 = vadd.f32 %v391, %v497
      %499 = vmatmul.f32.gmra.mxu0 %v369
      %v500 = vpop.f32.mrf.mxu0
      %v501 = vadd.f32 %v391, %v500
      %502 = vmatmul.f32.gmra.mxu0 %v370
      %v503 = vpop.f32.mrf.mxu0
      %v504 = vadd.f32 %v391, %v503
      %505 = vdwg.mxu0
      %v506 = vmax.f32 %v411, 0.0
      %v507 = vmax.f32 %v414, 0.0
      %v508 = vmax.f32 %v417, 0.0
      %v509 = vmax.f32 %v420, 0.0
      %v510 = vmax.f32 %v423, 0.0
      %v511 = vmax.f32 %v426, 0.0
      %v512 = vmax.f32 %v429, 0.0
      %v513 = vmax.f32 %v432, 0.0
      %v514 = vmax.f32 %v435, 0.0
      %v515 = vmax.f32 %v438, 0.0
      %v516 = vmax.f32 %v441, 0.0
      %v517 = vmax.f32 %v444, 0.0
      %v518 = vmax.f32 %v447, 0.0
      %v519 = vmax.f32 %v450, 0.0
      %v520 = vmax.f32 %v453, 0.0
      %v521 = vmax.f32 %v456, 0.0
      %v522 = vmax.f32 %v459, 0.0
      %v523 = vmax.f32 %v462, 0.0
      %v524 = vmax.f32 %v465, 0.0
      %v525 = vmax.f32 %v468, 0.0
      %v526 = vmax.f32 %v471, 0.0
      %v527 = vmax.f32 %v474, 0.0
      %v528 = vmax.f32 %v477, 0.0
      %v529 = vmax.f32 %v480, 0.0
      %v530 = vmax.f32 %v483, 0.0
      %v531 = vmax.f32 %v486, 0.0
      %v532 = vmax.f32 %v489, 0.0
      %v533 = vmax.f32 %v492, 0.0
      %v534 = vmax.f32 %v495, 0.0
      %v535 = vmax.f32 %v498, 0.0
      %v536 = vmax.f32 %v501, 0.0
      %v537 = vmax.f32 %v504, 0.0
      %538 = vmax.xlane.f32.xlu0 %v506
      %v539 = vpop.xlane.xlu0 %538
      %540 = vmax.xlane.f32.xlu0 %v507
      %v541 = vpop.xlane.xlu0 %540
      %542 = vmax.xlane.f32.xlu0 %v508
      %v543 = vpop.xlane.xlu0 %542
      %544 = vmax.xlane.f32.xlu0 %v509
      %v545 = vpop.xlane.xlu0 %544
      %546 = vmax.xlane.f32.xlu0 %v510
      %v547 = vpop.xlane.xlu0 %546
      %548 = vmax.xlane.f32.xlu0 %v511
      %v549 = vpop.xlane.xlu0 %548
      %550 = vmax.xlane.f32.xlu0 %v512
      %v551 = vpop.xlane.xlu0 %550
      %552 = vmax.xlane.f32.xlu0 %v513
      %v553 = vpop.xlane.xlu0 %552
      %554 = vmax.xlane.f32.xlu0 %v514
      %v555 = vpop.xlane.xlu0 %554
      %556 = vmax.xlane.f32.xlu0 %v515
      %v557 = vpop.xlane.xlu0 %556
      %558 = vmax.xlane.f32.xlu0 %v516
      %v559 = vpop.xlane.xlu0 %558
      %560 = vmax.xlane.f32.xlu0 %v517
      %v561 = vpop.xlane.xlu0 %560
      %562 = vmax.xlane.f32.xlu0 %v518
      %v563 = vpop.xlane.xlu0 %562
      %564 = vmax.xlane.f32.xlu0 %v519
      %v565 = vpop.xlane.xlu0 %564
      %566 = vmax.xlane.f32.xlu0 %v520
      %v567 = vpop.xlane.xlu0 %566
      %568 = vmax.xlane.f32.xlu0 %v521
      %v569 = vpop.xlane.xlu0 %568
      %570 = vmax.xlane.f32.xlu0 %v522
      %v571 = vpop.xlane.xlu0 %570
      %572 = vmax.xlane.f32.xlu0 %v523
      %v573 = vpop.xlane.xlu0 %572
      %574 = vmax.xlane.f32.xlu0 %v524
      %v575 = vpop.xlane.xlu0 %574
      %576 = vmax.xlane.f32.xlu0 %v525
      %v577 = vpop.xlane.xlu0 %576
      %578 = vmax.xlane.f32.xlu0 %v526
      %v579 = vpop.xlane.xlu0 %578
      %580 = vmax.xlane.f32.xlu0 %v527
      %v581 = vpop.xlane.xlu0 %580
      %582 = vmax.xlane.f32.xlu0 %v528
      %v583 = vpop.xlane.xlu0 %582
      %584 = vmax.xlane.f32.xlu0 %v529
      %v585 = vpop.xlane.xlu0 %584
      %586 = vmax.xlane.f32.xlu0 %v530
      %v587 = vpop.xlane.xlu0 %586
      %588 = vmax.xlane.f32.xlu0 %v531
      %v589 = vpop.xlane.xlu0 %588
      %590 = vmax.xlane.f32.xlu0 %v532
      %v591 = vpop.xlane.xlu0 %590
      %592 = vmax.xlane.f32.xlu0 %v533
      %v593 = vpop.xlane.xlu0 %592
      %594 = vmax.xlane.f32.xlu0 %v534
      %v595 = vpop.xlane.xlu0 %594
      %596 = vmax.xlane.f32.xlu0 %v535
      %v597 = vpop.xlane.xlu0 %596
      %598 = vmax.xlane.f32.xlu0 %v536
      %v599 = vpop.xlane.xlu0 %598
      %600 = vmax.xlane.f32.xlu0 %v537
      %v601 = vpop.xlane.xlu0 %600
      %v602 = vsub.f32 %v506, %v539
      %v603 = vsub.f32 %v507, %v541
      %v604 = vsub.f32 %v508, %v543
      %v605 = vsub.f32 %v509, %v545
      %v606 = vsub.f32 %v510, %v547
      %v607 = vsub.f32 %v511, %v549
      %v608 = vsub.f32 %v512, %v551
      %v609 = vsub.f32 %v513, %v553
      %v610 = vsub.f32 %v514, %v555
      %v611 = vsub.f32 %v515, %v557
      %v612 = vsub.f32 %v516, %v559
      %v613 = vsub.f32 %v517, %v561
      %v614 = vsub.f32 %v518, %v563
      %v615 = vsub.f32 %v519, %v565
      %v616 = vsub.f32 %v520, %v567
      %v617 = vsub.f32 %v521, %v569
      %v618 = vsub.f32 %v522, %v571
      %v619 = vsub.f32 %v523, %v573
      %v620 = vsub.f32 %v524, %v575
      %v621 = vsub.f32 %v525, %v577
      %v622 = vsub.f32 %v526, %v579
      %v623 = vsub.f32 %v527, %v581
      %v624 = vsub.f32 %v528, %v583
      %v625 = vsub.f32 %v529, %v585
      %v626 = vsub.f32 %v530, %v587
      %v627 = vsub.f32 %v531, %v589
      %v628 = vsub.f32 %v532, %v591
      %v629 = vsub.f32 %v533, %v593
      %v630 = vsub.f32 %v534, %v595
      %v631 = vsub.f32 %v535, %v597
      %v632 = vsub.f32 %v536, %v599
      %v633 = vsub.f32 %v537, %v601
      %v634 = vmul.f32 %v602, 1.442695
      %v635 = vpow.pop %v634
      %v636 = vmul.f32 %v603, 1.442695
      %v637 = vpow.pop %v636
      %v638 = vmul.f32 %v604, 1.442695
      %v639 = vpow.pop %v638
      %v640 = vmul.f32 %v605, 1.442695
      %v641 = vpow.pop %v640
      %v642 = vmul.f32 %v606, 1.442695
      %v643 = vpow.pop %v642
      %v644 = vmul.f32 %v607, 1.442695
      %v645 = vpow.pop %v644
      %v646 = vmul.f32 %v608, 1.442695
      %v647 = vpow.pop %v646
      %v648 = vmul.f32 %v609, 1.442695
      %v649 = vpow.pop %v648
      %v650 = vmul.f32 %v610, 1.442695
      %v651 = vpow.pop %v650
      %v652 = vmul.f32 %v611, 1.442695
      %v653 = vpow.pop %v652
      %v654 = vmul.f32 %v612, 1.442695
      %v655 = vpow.pop %v654
      %v656 = vmul.f32 %v613, 1.442695
      %v657 = vpow.pop %v656
      %v658 = vmul.f32 %v614, 1.442695
      %v659 = vpow.pop %v658
      %v660 = vmul.f32 %v615, 1.442695
      %v661 = vpow.pop %v660
      %v662 = vmul.f32 %v616, 1.442695
      %v663 = vpow.pop %v662
      %v664 = vmul.f32 %v617, 1.442695
      %v665 = vpow.pop %v664
      %v666 = vmul.f32 %v618, 1.442695
      %v667 = vpow.pop %v666
      %v668 = vmul.f32 %v619, 1.442695
      %v669 = vpow.pop %v668
      %v670 = vmul.f32 %v620, 1.442695
      %v671 = vpow.pop %v670
      %v672 = vmul.f32 %v621, 1.442695
      %v673 = vpow.pop %v672
      %v674 = vmul.f32 %v622, 1.442695
      %v675 = vpow.pop %v674
      %v676 = vmul.f32 %v623, 1.442695
      %v677 = vpow.pop %v676
      %v678 = vmul.f32 %v624, 1.442695
      %v679 = vpow.pop %v678
      %v680 = vmul.f32 %v625, 1.442695
      %v681 = vpow.pop %v680
      %v682 = vmul.f32 %v626, 1.442695
      %v683 = vpow.pop %v682
      %v684 = vmul.f32 %v627, 1.442695
      %v685 = vpow.pop %v684
      %v686 = vmul.f32 %v628, 1.442695
      %v687 = vpow.pop %v686
      %v688 = vmul.f32 %v629, 1.442695
      %v689 = vpow.pop %v688
      %v690 = vmul.f32 %v630, 1.442695
      %v691 = vpow.pop %v690
      %v692 = vmul.f32 %v631, 1.442695
      %v693 = vpow.pop %v692
      %v694 = vmul.f32 %v632, 1.442695
      %v695 = vpow.pop %v694
      %v696 = vmul.f32 %v633, 1.442695
      %v697 = vpow.pop %v696
      %698 = vadd.xlane.f32.xlu0 %v635
      %v699 = vpop.xlane.xlu0 %698
      %700 = vadd.xlane.f32.xlu0 %v637
      %v701 = vpop.xlane.xlu0 %700
      %702 = vadd.xlane.f32.xlu0 %v639
      %v703 = vpop.xlane.xlu0 %702
      %704 = vadd.xlane.f32.xlu0 %v641
      %v705 = vpop.xlane.xlu0 %704
      %706 = vadd.xlane.f32.xlu0 %v643
      %v707 = vpop.xlane.xlu0 %706
      %708 = vadd.xlane.f32.xlu0 %v645
      %v709 = vpop.xlane.xlu0 %708
      %710 = vadd.xlane.f32.xlu0 %v647
      %v711 = vpop.xlane.xlu0 %710
      %712 = vadd.xlane.f32.xlu0 %v649
      %v713 = vpop.xlane.xlu0 %712
      %714 = vadd.xlane.f32.xlu0 %v651
      %v715 = vpop.xlane.xlu0 %714
      %716 = vadd.xlane.f32.xlu0 %v653
      %v717 = vpop.xlane.xlu0 %716
      %718 = vadd.xlane.f32.xlu0 %v655
      %v719 = vpop.xlane.xlu0 %718
      %720 = vadd.xlane.f32.xlu0 %v657
      %v721 = vpop.xlane.xlu0 %720
      %722 = vadd.xlane.f32.xlu0 %v659
      %v723 = vpop.xlane.xlu0 %722
      %724 = vadd.xlane.f32.xlu0 %v661
      %v725 = vpop.xlane.xlu0 %724
      %726 = vadd.xlane.f32.xlu0 %v663
      %v727 = vpop.xlane.xlu0 %726
      %728 = vadd.xlane.f32.xlu0 %v665
      %v729 = vpop.xlane.xlu0 %728
      %730 = vadd.xlane.f32.xlu0 %v667
      %v731 = vpop.xlane.xlu0 %730
      %732 = vadd.xlane.f32.xlu0 %v669
      %v733 = vpop.xlane.xlu0 %732
      %734 = vadd.xlane.f32.xlu0 %v671
      %v735 = vpop.xlane.xlu0 %734
      %736 = vadd.xlane.f32.xlu0 %v673
      %v737 = vpop.xlane.xlu0 %736
      %738 = vadd.xlane.f32.xlu0 %v675
      %v739 = vpop.xlane.xlu0 %738
      %740 = vadd.xlane.f32.xlu0 %v677
      %v741 = vpop.xlane.xlu0 %740
      %742 = vadd.xlane.f32.xlu0 %v679
      %v743 = vpop.xlane.xlu0 %742
      %744 = vadd.xlane.f32.xlu0 %v681
      %v745 = vpop.xlane.xlu0 %744
      %746 = vadd.xlane.f32.xlu0 %v683
      %v747 = vpop.xlane.xlu0 %746
      %748 = vadd.xlane.f32.xlu0 %v685
      %v749 = vpop.xlane.xlu0 %748
      %750 = vadd.xlane.f32.xlu0 %v687
      %v751 = vpop.xlane.xlu0 %750
      %752 = vadd.xlane.f32.xlu0 %v689
      %v753 = vpop.xlane.xlu0 %752
      %754 = vadd.xlane.f32.xlu0 %v691
      %v755 = vpop.xlane.xlu0 %754
      %756 = vadd.xlane.f32.xlu0 %v693
      %v757 = vpop.xlane.xlu0 %756
      %758 = vadd.xlane.f32.xlu0 %v695
      %v759 = vpop.xlane.xlu0 %758
      %760 = vadd.xlane.f32.xlu0 %v697
      %v761 = vpop.xlane.xlu0 %760
      %v762 = vrcp.pop %v699
      %v763 = vrcp.pop %v701
      %v764 = vrcp.pop %v703
      %v765 = vrcp.pop %v705
      %v766 = vrcp.pop %v707
      %v767 = vrcp.pop %v709
      %v768 = vrcp.pop %v711
      %v769 = vrcp.pop %v713
      %v770 = vrcp.pop %v715
      %v771 = vrcp.pop %v717
      %v772 = vrcp.pop %v719
      %v773 = vrcp.pop %v721
      %v774 = vrcp.pop %v723
      %v775 = vrcp.pop %v725
      %v776 = vrcp.pop %v727
      %v777 = vrcp.pop %v729
      %v778 = vrcp.pop %v731
      %v779 = vrcp.pop %v733
      %v780 = vrcp.pop %v735
      %v781 = vrcp.pop %v737
      %v782 = vrcp.pop %v739
      %v783 = vrcp.pop %v741
      %v784 = vrcp.pop %v743
      %v785 = vrcp.pop %v745
      %v786 = vrcp.pop %v747
      %v787 = vrcp.pop %v749
      %v788 = vrcp.pop %v751
      %v789 = vrcp.pop %v753
      %v790 = vrcp.pop %v755
      %v791 = vrcp.pop %v757
      %v792 = vrcp.pop %v759
      %v793 = vrcp.pop %v761
      %v794 = vmul.f32 %v635, %v762
      %v795 = vmul.f32 %v637, %v763
      %v796 = vmul.f32 %v639, %v764
      %v797 = vmul.f32 %v641, %v765
      %v798 = vmul.f32 %v643, %v766
      %v799 = vmul.f32 %v645, %v767
      %v800 = vmul.f32 %v647, %v768
      %v801 = vmul.f32 %v649, %v769
      %v802 = vmul.f32 %v651, %v770
      %v803 = vmul.f32 %v653, %v771
      %v804 = vmul.f32 %v655, %v772
      %v805 = vmul.f32 %v657, %v773
      %v806 = vmul.f32 %v659, %v774
      %v807 = vmul.f32 %v661, %v775
      %v808 = vmul.f32 %v663, %v776
      %v809 = vmul.f32 %v665, %v777
      %v810 = vmul.f32 %v667, %v778
      %v811 = vmul.f32 %v669, %v779
      %v812 = vmul.f32 %v671, %v780
      %v813 = vmul.f32 %v673, %v781
      %v814 = vmul.f32 %v675, %v782
      %v815 = vmul.f32 %v677, %v783
      %v816 = vmul.f32 %v679, %v784
      %v817 = vmul.f32 %v681, %v785
      %v818 = vmul.f32 %v683, %v786
      %v819 = vmul.f32 %v685, %v787
      %v820 = vmul.f32 %v687, %v788
      %v821 = vmul.f32 %v689, %v789
      %v822 = vmul.f32 %v691, %v790
      %v823 = vmul.f32 %v693, %v791
      %v824 = vmul.f32 %v695, %v792
      %v825 = vmul.f32 %v697, %v793
      %s826 = scalar_lea.vmem %s1, 256
      %v827 = vld [vmem:[%s826] sm:$0xff]
      %v828 = vld [vmem:[%s826 + $0x8] sm:$0xff]
      %v829 = vld [vmem:[%s826 + $0x10] sm:$0xff]
      %v830 = vld [vmem:[%s826 + $0x18] sm:$0xff]
      %v831 = vld [vmem:[%s826 + $0x20] sm:$0xff]
      %v832 = vld [vmem:[%s826 + $0x28] sm:$0xff]
      %v833 = vld [vmem:[%s826 + $0x30] sm:$0xff]
      %v834 = vld [vmem:[%s826 + $0x38] sm:$0xff]
      %v835 = vld [vmem:[%s826 + $0x40] sm:$0xff]
      %v836 = vld [vmem:[%s826 + $0x48] sm:$0xff]
      %v837 = vld [vmem:[%s826 + $0x50] sm:$0xff]
      %v838 = vld [vmem:[%s826 + $0x58] sm:$0xff]
      %v839 = vld [vmem:[%s826 + $0x60] sm:$0xff]
      %v840 = vld [vmem:[%s826 + $0x68] sm:$0xff]
      %v841 = vld [vmem:[%s826 + $0x70] sm:$0xff]
      %v842 = vld [vmem:[%s826 + $0x78] sm:$0xff]
      %s843 = scalar_lea.vmem %s2, 2
      %v844 = vld [vmem:[%s843] sm:$0x1]
      %v846 = vperm.slane %v844, 0
      %848 = vmatpush.msra.mxu0 %v842
      %849 = vmatpush.msra.mxu0 %v841
      %850 = vmatpush.msra.mxu0 %v840
      %851 = vmatpush.msra.mxu0 %v839
      %852 = vmatpush.msra.mxu0 %v838
      %853 = vmatpush.msra.mxu0 %v837
      %854 = vmatpush.msra.mxu0 %v836
      %855 = vmatpush.msra.mxu0 %v835
      %856 = vmatpush.msra.mxu0 %v834
      %857 = vmatpush.msra.mxu0 %v833
      %858 = vmatpush.msra.mxu0 %v832
      %859 = vmatpush.msra.mxu0 %v831
      %860 = vmatpush.msra.mxu0 %v830
      %861 = vmatpush.msra.mxu0 %v829
      %862 = vmatpush.msra.mxu0 %v828
      %863 = vmatpush.msra.mxu0 %v827
      %864 = vmatmul.f32.gmra.mxu0 %v794
      %v865 = vpop.f32.mrf.mxu0
      %v866 = vadd.f32 %v846, %v865
      %867 = vmatmul.f32.gmra.mxu0 %v795
      %v868 = vpop.f32.mrf.mxu0
      %v869 = vadd.f32 %v846, %v868
      %870 = vmatmul.f32.gmra.mxu0 %v796
      %v871 = vpop.f32.mrf.mxu0
      %v872 = vadd.f32 %v846, %v871
      %873 = vmatmul.f32.gmra.mxu0 %v797
      %v874 = vpop.f32.mrf.mxu0
      %v875 = vadd.f32 %v846, %v874
      %876 = vmatmul.f32.gmra.mxu0 %v798
      %v877 = vpop.f32.mrf.mxu0
      %v878 = vadd.f32 %v846, %v877
      %879 = vmatmul.f32.gmra.mxu0 %v799
      %v880 = vpop.f32.mrf.mxu0
      %v881 = vadd.f32 %v846, %v880
      %882 = vmatmul.f32.gmra.mxu0 %v800
      %v883 = vpop.f32.mrf.mxu0
      %v884 = vadd.f32 %v846, %v883
      %885 = vmatmul.f32.gmra.mxu0 %v801
      %v886 = vpop.f32.mrf.mxu0
      %v887 = vadd.f32 %v846, %v886
      %888 = vmatmul.f32.gmra.mxu0 %v802
      %v889 = vpop.f32.mrf.mxu0
      %v890 = vadd.f32 %v846, %v889
      %891 = vmatmul.f32.gmra.mxu0 %v803
      %v892 = vpop.f32.mrf.mxu0
      %v893 = vadd.f32 %v846, %v892
      %894 = vmatmul.f32.gmra.mxu0 %v804
      %v895 = vpop.f32.mrf.mxu0
      %v896 = vadd.f32 %v846, %v895
      %897 = vmatmul.f32.gmra.mxu0 %v805
      %v898 = vpop.f32.mrf.mxu0
      %v899 = vadd.f32 %v846, %v898
      %900 = vmatmul.f32.gmra.mxu0 %v806
      %v901 = vpop.f32.mrf.mxu0
      %v902 = vadd.f32 %v846, %v901
      %903 = vmatmul.f32.gmra.mxu0 %v807
      %v904 = vpop.f32.mrf.mxu0
      %v905 = vadd.f32 %v846, %v904
      %906 = vmatmul.f32.gmra.mxu0 %v808
      %v907 = vpop.f32.mrf.mxu0
      %v908 = vadd.f32 %v846, %v907
      %909 = vmatmul.f32.gmra.mxu0 %v809
      %v910 = vpop.f32.mrf.mxu0
      %v911 = vadd.f32 %v846, %v910
      %912 = vmatmul.f32.gmra.mxu0 %v810
      %v913 = vpop.f32.mrf.mxu0
      %v914 = vadd.f32 %v846, %v913
      %915 = vmatmul.f32.gmra.mxu0 %v811
      %v916 = vpop.f32.mrf.mxu0
      %v917 = vadd.f32 %v846, %v916
      %918 = vmatmul.f32.gmra.mxu0 %v812
      %v919 = vpop.f32.mrf.mxu0
      %v920 = vadd.f32 %v846, %v919
      %921 = vmatmul.f32.gmra.mxu0 %v813
      %v922 = vpop.f32.mrf.mxu0
      %v923 = vadd.f32 %v846, %v922
      %924 = vmatmul.f32.gmra.mxu0 %v814
      %v925 = vpop.f32.mrf.mxu0
      %v926 = vadd.f32 %v846, %v925
      %927 = vmatmul.f32.gmra.mxu0 %v815
      %v928 = vpop.f32.mrf.mxu0
      %v929 = vadd.f32 %v846, %v928
      %930 = vmatmul.f32.gmra.mxu0 %v816
      %v931 = vpop.f32.mrf.mxu0
      %v932 = vadd.f32 %v846, %v931
      %933 = vmatmul.f32.gmra.mxu0 %v817
      %v934 = vpop.f32.mrf.mxu0
      %v935 = vadd.f32 %v846, %v934
      %936 = vmatmul.f32.gmra.mxu0 %v818
      %v937 = vpop.f32.mrf.mxu0
      %v938 = vadd.f32 %v846, %v937
      %939 = vmatmul.f32.gmra.mxu0 %v819
      %v940 = vpop.f32.mrf.mxu0
      %v941 = vadd.f32 %v846, %v940
      %942 = vmatmul.f32.gmra.mxu0 %v820
      %v943 = vpop.f32.mrf.mxu0
      %v944 = vadd.f32 %v846, %v943
      %945 = vmatmul.f32.gmra.mxu0 %v821
      %v946 = vpop.f32.mrf.mxu0
      %v947 = vadd.f32 %v846, %v946
      %948 = vmatmul.f32.gmra.mxu0 %v822
      %v949 = vpop.f32.mrf.mxu0
      %v950 = vadd.f32 %v846, %v949
      %951 = vmatmul.f32.gmra.mxu0 %v823
      %v952 = vpop.f32.mrf.mxu0
      %v953 = vadd.f32 %v846, %v952
      %954 = vmatmul.f32.gmra.mxu0 %v824
      %v955 = vpop.f32.mrf.mxu0
      %v956 = vadd.f32 %v846, %v955
      %957 = vmatmul.f32.gmra.mxu0 %v825
      %v958 = vpop.f32.mrf.mxu0
      %v959 = vadd.f32 %v846, %v958
      %960 = vdwg.mxu0
      %v961 = vtanh.pop %v866
      %v962 = vtanh.pop %v869
      %v963 = vtanh.pop %v872
      %v964 = vtanh.pop %v875
      %v965 = vtanh.pop %v878
      %v966 = vtanh.pop %v881
      %v967 = vtanh.pop %v884
      %v968 = vtanh.pop %v887
      %v969 = vtanh.pop %v890
      %v970 = vtanh.pop %v893
      %v971 = vtanh.pop %v896
      %v972 = vtanh.pop %v899
      %v973 = vtanh.pop %v902
      %v974 = vtanh.pop %v905
      %v975 = vtanh.pop %v908
      %v976 = vtanh.pop %v911
      %v977 = vtanh.pop %v914
      %v978 = vtanh.pop %v917
      %v979 = vtanh.pop %v920
      %v980 = vtanh.pop %v923
      %v981 = vtanh.pop %v926
      %v982 = vtanh.pop %v929
      %v983 = vtanh.pop %v932
      %v984 = vtanh.pop %v935
      %v985 = vtanh.pop %v938
      %v986 = vtanh.pop %v941
      %v987 = vtanh.pop %v944
      %v988 = vtanh.pop %v947
      %v989 = vtanh.pop %v950
      %v990 = vtanh.pop %v953
      %v991 = vtanh.pop %v956
      %v992 = vtanh.pop %v959
      %993 = vst [vmem:[%s172] sm:$0xff] %v961
      %994 = vst [vmem:[%s172 + $0x8] sm:$0xff] %v962
      %995 = vst [vmem:[%s172 + $0x10] sm:$0xff] %v963
      %996 = vst [vmem:[%s172 + $0x18] sm:$0xff] %v964
      %997 = vst [vmem:[%s172 + $0x20] sm:$0xff] %v965
      %998 = vst [vmem:[%s172 + $0x28] sm:$0xff] %v966
      %999 = vst [vmem:[%s172 + $0x30] sm:$0xff] %v967
      %1000 = vst [vmem:[%s172 + $0x38] sm:$0xff] %v968
      %1001 = vst [vmem:[%s172 + $0x40] sm:$0xff] %v969
      %1002 = vst [vmem:[%s172 + $0x48] sm:$0xff] %v970
      %1003 = vst [vmem:[%s172 + $0x50] sm:$0xff] %v971
      %1004 = vst [vmem:[%s172 + $0x58] sm:$0xff] %v972
      %1005 = vst [vmem:[%s172 + $0x60] sm:$0xff] %v973
      %1006 = vst [vmem:[%s172 + $0x68] sm:$0xff] %v974
      %1007 = vst [vmem:[%s172 + $0x70] sm:$0xff] %v975
      %1008 = vst [vmem:[%s172 + $0x78] sm:$0xff] %v976
      %1009 = vst [vmem:[%s172 + $0x80] sm:$0xff] %v977
      %1010 = vst [vmem:[%s172 + $0x88] sm:$0xff] %v978
      %1011 = vst [vmem:[%s172 + $0x90] sm:$0xff] %v979
      %1012 = vst [vmem:[%s172 + $0x98] sm:$0xff] %v980
      %1013 = vst [vmem:[%s172 + $0xa0] sm:$0xff] %v981
      %1014 = vst [vmem:[%s172 + $0xa8] sm:$0xff] %v982
      %1015 = vst [vmem:[%s172 + $0xb0] sm:$0xff] %v983
      %1016 = vst [vmem:[%s172 + $0xb8] sm:$0xff] %v984
      %1017 = vst [vmem:[%s172 + $0xc0] sm:$0xff] %v985
      %1018 = vst [vmem:[%s172 + $0xc8] sm:$0xff] %v986
      %1019 = vst [vmem:[%s172 + $0xd0] sm:$0xff] %v987
      %1020 = vst [vmem:[%s172 + $0xd8] sm:$0xff] %v988
      %1021 = vst [vmem:[%s172 + $0xe0] sm:$0xff] %v989
      %1022 = vst [vmem:[%s172 + $0xe8] sm:$0xff] %v990
      %1023 = vst [vmem:[%s172 + $0xf0] sm:$0xff] %v991
      %1024 = vst [vmem:[%s172 + $0xf8] sm:$0xff] %v992
      %s1025 = smul.u32 32, %s14
      %p1026 = scmp.lt.s32.totalorder %s1025, 63
      %s1027 = scalar_select %p1026, %s1025, 63
      %s1028 = smul.addr %s1027, 8
      %s1029 = scalar_lea.vmem %s3, %s1028
      // Predicated region
      $region33: #{rl_prediction_forward.1} parent=31 // pred_check
        %p1030 = pneg %p100
      $region34: #{rl_prediction_forward.1} parent=31 // pred_check_branch
        %1032 = sbr.rel (%p1030) target = $region36
      $region35: #{rl_prediction_forward.1} parent=31 // pred_region
        %s1033 = smul.u32 32, %s14
      $region36: #{rl_prediction_forward.1} parent=31 // pred_fallthru
        _
    $region32: #{rl_prediction_forward.1} parent=5 // pred_fallthru
      _
    %p1034 = scmp.le.s32.totalorder 2, %s9
    // Predicated region
    $region37: #{rl_prediction_forward.1} parent=5 // pred_check
      %p1035 = pneg %p1034
    $region38: #{rl_prediction_forward.1} parent=5 // pred_check_branch
      %1037 = sbr.rel (%p1035) target = $region40
    $region39: #{rl_prediction_forward.1} parent=5 // pred_region
      %s1038 = ssub.s32 %s9, 2
      // Predicated region
      $region41: #{rl_prediction_forward.1} parent=39 // pred_check
        %p1039 = pneg %p106
      $region42: #{rl_prediction_forward.1} parent=39 // pred_check_branch
        %1041 = sbr.rel (%p1039) target = $region44
      $region43: #{rl_prediction_forward.1} parent=39 // pred_region
        %s1042 = smul.u32 32, %s15
        %p1043 = scmp.lt.s32.totalorder %s1042, 63
        %s1044 = scalar_select %p1043, %s1042, 63
        %s1045 = smul.addr %s1044, 8
        %s1046 = scalar_lea.vmem %s3, %s1045
      $region44: #{rl_prediction_forward.1} parent=39 // pred_fallthru
        _
    $region40: #{rl_prediction_forward.1} parent=5 // pred_fallthru
      _
  $region6: #{rl_prediction_forward.1} parent=0 // loop_footer
    %s13 = sadd.s32 1, %s9
  $region7: #{rl_prediction_forward.1} parent=0 // loop_footer_branch
    %8 = sbr.rel target = $region3
  $region8: #{rl_prediction_forward.1} parent=0 // loop_exit
    _

</llo_original>
